<compile_context>
chip_gen: v5e
topology: v5e:2x2
jax: 0.10.0
libtpu: 0.0.40
codegen_flags: <defaults>
</compile_context>

<pallas_src>
import math

import jax
import jax.numpy as jnp
from jax.experimental import pallas as pl
from jax.experimental.pallas import tpu as pltpu


def _pos_enc_kernel(inv_freq_ref, p_ref, q_ref, o_ref):
    # inv_freq_ref: (1, d_model)      per-lane angular frequency w (pairs share w)
    # p_ref, q_ref: (tile_l, d_model) resident tables (constant index_map):
    #     even lanes:  P =  cos(j*w),  Q = sin(j*w)
    #     odd  lanes:  P = -sin(j*w),  Q = cos(j*w)
    # o_ref:        (tile_l, d_model) output block; rows are positions b..b+tile_l-1
    tile_l = o_ref.shape[0]
    base = (pl.program_id(0) * tile_l).astype(jnp.float32)
    angle0 = base * inv_freq_ref[...]            # (1, d_model)
    s_b = jnp.sin(angle0)                        # sin(b*w) per lane (one row only)
    c_b = jnp.cos(angle0)                        # cos(b*w) per lane (one row only)
    # Broadcast rows * resident tables: 2 mul + 1 add per output vreg.
    #   even lane: sin(bw)cos(jw) + cos(bw)sin(jw) = sin((b+j)w)
    #   odd  lane: sin(bw)(-sin(jw)) + cos(bw)cos(jw) = cos((b+j)w)
    o_ref[...] = (s_b * p_ref[...] + c_b * q_ref[...]).astype(o_ref.dtype)


def _round_up(x: int, m: int) -> int:
    return ((x + m - 1) // m) * m


def _is_multi_tensorcore() -> bool:
    """Best-effort: does one JAX device expose >1 TensorCore (megacore / v7x)?"""
    try:
        kind = jax.devices()[0].device_kind.lower()
    except Exception:
        return False
    if "v7" in kind:
        return True
    if "lite" in kind or "v5e" in kind or "v6" in kind:
        return False
    # v4 / v5p are megacore parts; everything else assume single TC.
    return ("v4" in kind) or ("v5" in kind)


def positional_encoding(length: int, d_model: int = 512, tile_l: int = 512,
                        dtype=jnp.float32) -> jax.Array:
    """Returns pe[:, :length] with shape (1, length, d_model)."""
    assert d_model % 2 == 0, "d_model must be even (sin/cos pairs)"
    assert length > 0

    # ---- tile selection --------------------------------------------------
    needed = _round_up(length, 8)
    if _is_multi_tensorcore():
        # Keep >=2 grid steps when the length allows, so the "parallel" axis
        # shards across both TensorCores (v7x).
        target = max(8, _round_up(pl.cdiv(length, 2), 8))
    else:
        # Single-TC (v5e/v6e): a bigger single block beats extra grid steps.
        target = needed
    tile_l = max(8, min(tile_l, target, needed))
    tile_l = (tile_l // 8) * 8
    # VMEM cap: 2 tables (+headroom for buffering) + double-buffered output
    # ~= 6 * tile_l * d_model * 4 B.  Keep <= ~16 MiB (v7x scoped default 32 MiB).
    vmem_budget = 16 * 1024 * 1024
    max_tile = max(8, (vmem_budget // (6 * 4 * d_model)) // 8 * 8)
    tile_l = min(tile_l, max_tile)

    num_blocks = pl.cdiv(length, tile_l)

    # ---- constant tables (computed once, outside the kernel) --------------
    inv_freq_half = jnp.exp(
        jnp.arange(0, d_model, 2, dtype=jnp.float32) * (-math.log(10000.0) / d_model))
    inv_freq = jnp.repeat(inv_freq_half, 2)[None, :]                 # (1, d_model)
    j = jnp.arange(tile_l, dtype=jnp.float32)[:, None]               # (tile_l, 1)
    ang = j * inv_freq                                               # (tile_l, d_model)
    sin_t, cos_t = jnp.sin(ang), jnp.cos(ang)
    odd = (jnp.arange(d_model) % 2 == 1)[None, :]
    p_tbl = jnp.where(odd, -sin_t, cos_t).astype(jnp.float32)        # (tile_l, d_model)
    q_tbl = jnp.where(odd, cos_t, sin_t).astype(jnp.float32)         # (tile_l, d_model)

    row_spec = pl.BlockSpec((1, d_model), lambda l: (0, 0))
    tbl_spec = pl.BlockSpec((tile_l, d_model), lambda l: (0, 0))     # resident

    cost = pl.CostEstimate(
        flops=3 * length * d_model,
        transcendentals=2 * d_model * num_blocks,
        bytes_accessed=length * d_model * 4 + 2 * tile_l * d_model * 4 + d_model * 4,
    )

    pe = pl.pallas_call(
        _pos_enc_kernel,
        out_shape=jax.ShapeDtypeStruct((length, d_model), dtype),
        grid_spec=pltpu.PrefetchScalarGridSpec(
            num_scalar_prefetch=0,
            grid=(num_blocks,),
            in_specs=[row_spec, tbl_spec, tbl_spec],
            out_specs=pl.BlockSpec((tile_l, d_model), lambda l: (l, 0)),
        ),
        compiler_params=pltpu.CompilerParams(
            dimension_semantics=("parallel",),
        ),
        cost_estimate=cost,
    )(inv_freq, p_tbl, q_tbl)

    return pe[None]  # (1, length, d_model); unit-dim reshape, no data movement


def _reference(length: int, d_model: int) -> jax.Array:
    # Pure-JAX reference mirroring the PyTorch buffer construction.
    position = jnp.arange(length, dtype=jnp.float32)[:, None]
    div_term = jnp.exp(
        jnp.arange(0, d_model, 2, dtype=jnp.float32)
        * -(math.log(10000.0) / d_model)
    )
    pe = jnp.zeros((length, d_model), jnp.float32)
    pe = pe.at[:, 0::2].set(jnp.sin(position * div_term))
    pe = pe.at[:, 1::2].set(jnp.cos(position * div_term))
    return pe[None]


if __name__ == "__main__":
    # No learned parameters or tensor inputs: forward takes only `length`.
    # Key created for protocol consistency (outputs are deterministic anyway).
    key = jax.random.PRNGKey(0)
    del key

    length, d_model = 512, 128
    out = jax.block_until_ready(positional_encoding(length, d_model=d_model, tile_l=512))
    ref = _reference(length, d_model)
    assert out.shape == (1, length, d_model)
    assert out.dtype == jnp.float32
    assert float(jnp.max(jnp.abs(out - ref))) < 1e-4, float(jnp.max(jnp.abs(out - ref)))

    # Ragged length: exact out_shape, masked final block, no wrapper slice.
    out2 = jax.block_until_ready(positional_encoding(40, d_model=d_model))
    assert out2.shape == (1, 40, d_model)
    assert float(jnp.max(jnp.abs(out2 - _reference(40, d_model)))) < 1e-4

    # Multi-block path with nonzero base (exercises the in-kernel angle addition).
    out3 = jax.block_until_ready(positional_encoding(200, d_model=d_model, tile_l=64))
    assert out3.shape == (1, 200, d_model)
    assert float(jnp.max(jnp.abs(out3 - _reference(200, d_model)))) < 1e-4

    print("KERNEL_OK")
</pallas_src>

<mosaic_0001>
module attributes {stable_mosaic.version = 11 : i64} {
  func.func @_pos_enc_kernel(%arg0: i32, %arg1: memref<1x128xf32, #tpu.memory_space<vmem>>, %arg2: memref<512x128xf32, #tpu.memory_space<vmem>>, %arg3: memref<512x128xf32, #tpu.memory_space<vmem>>, %arg4: memref<512x128xf32, #tpu.memory_space<vmem>>) attributes {dimension_semantics = [#tpu.dimension_semantics<parallel>], iteration_bounds = array<i64: 1>, scalar_prefetch = 0 : i64, scratch_operands = 0 : i64, tpu.core_type = #tpu.core_type<tc>, window_params = [{pipeline_mode = #tpu.pipeline_mode<synchronous>, transform_indices = @transform_0, window_bounds = array<i64: 1, 128>}, {pipeline_mode = #tpu.pipeline_mode<synchronous>, transform_indices = @transform_1, window_bounds = array<i64: 512, 128>}, {pipeline_mode = #tpu.pipeline_mode<synchronous>, transform_indices = @transform_2, window_bounds = array<i64: 512, 128>}, {transform_indices = @transform_3, window_bounds = array<i64: 512, 128>}]} {
    %c512_i32 = arith.constant 512 : i32
    %0 = arith.muli %arg0, %c512_i32 : i32
    %1 = arith.sitofp %0 : i32 to f32
    %c0 = arith.constant 0 : index
    %c0_0 = arith.constant 0 : index
    %2 = vector.load %arg1[%c0, %c0_0] : memref<1x128xf32, #tpu.memory_space<vmem>>, vector<1x128xf32>
    %3 = vector.broadcast %1 : f32 to vector<1x128xf32>
    %4 = arith.mulf %3, %2 : vector<1x128xf32>
    %5 = math.sin %4 : vector<1x128xf32>
    %6 = math.cos %4 : vector<1x128xf32>
    %c0_1 = arith.constant 0 : index
    %c0_2 = arith.constant 0 : index
    %7 = vector.load %arg2[%c0_1, %c0_2] : memref<512x128xf32, #tpu.memory_space<vmem>>, vector<512x128xf32>
    %8 = vector.broadcast %5 : vector<1x128xf32> to vector<512x128xf32>
    %9 = arith.mulf %8, %7 : vector<512x128xf32>
    %c0_3 = arith.constant 0 : index
    %c0_4 = arith.constant 0 : index
    %10 = vector.load %arg3[%c0_3, %c0_4] : memref<512x128xf32, #tpu.memory_space<vmem>>, vector<512x128xf32>
    %11 = vector.broadcast %6 : vector<1x128xf32> to vector<512x128xf32>
    %12 = arith.mulf %11, %10 : vector<512x128xf32>
    %13 = arith.addf %9, %12 : vector<512x128xf32>
    %c0_5 = arith.constant 0 : index
    %c0_6 = arith.constant 0 : index
    %14 = vector.load %arg4[%c0_5, %c0_6] : memref<512x128xf32, #tpu.memory_space<vmem>>, vector<512x128xf32>
    tpu.vector_store %arg4[%c0_5, %c0_6], %13 {strides = array<i32>} : memref<512x128xf32, #tpu.memory_space<vmem>>, vector<512x128xf32>,
    return
  }
  func.func @transform_0(%arg0: i32) -> (i32, i32) {
    %c0_i32 = arith.constant 0 : i32
    %c0_i32_0 = arith.constant 0 : i32
    %c0_i32_1 = arith.constant 0 : i32
    return %c0_i32, %c0_i32_0 : i32, i32
  }
  func.func @transform_1(%arg0: i32) -> (i32, i32) {
    %c0_i32 = arith.constant 0 : i32
    %c0_i32_0 = arith.constant 0 : i32
    %c0_i32_1 = arith.constant 0 : i32
    return %c0_i32, %c0_i32_0 : i32, i32
  }
  func.func @transform_2(%arg0: i32) -> (i32, i32) {
    %c0_i32 = arith.constant 0 : i32
    %c0_i32_0 = arith.constant 0 : i32
    %c0_i32_1 = arith.constant 0 : i32
    return %c0_i32, %c0_i32_0 : i32, i32
  }
  func.func @transform_3(%arg0: i32) -> (i32, i32) {
    %c0_i32 = arith.constant 0 : i32
    %c0_i32_0 = arith.constant 0 : i32
    return %arg0, %c0_i32 : i32, i32
  }
}

</mosaic_0001>

<llo_original>
// kernel: tpu_custom_call.1
$region0: #{tpu_custom_call.1}
  #allocation0 [shape = 'u32[]', space=smem, size = 0x4, offset = 0x4, fixed_abs, tag = 'smem constant byte address 0x4 - core index']
  #allocation1 [shape = 'u32[72,128]{1,0:T(1,128)}', space=vmem, size = 0x9000, scoped, tag = 'internal scratch']
  %s0 = inlined_call_operand.hbm [shape: f32[1,128], index: 0, kind: input, shape index: {}]
  %s1 = inlined_call_operand.hbm [shape: f32[512,128], index: 1, kind: input, shape index: {}]
  %s2 = inlined_call_operand.hbm [shape: f32[512,128], index: 2, kind: input, shape index: {}]
  %s3 = inlined_call_operand.hbm [shape: f32[512,128], index: 3, kind: output, shape index: {}]
  %s4 = sld [smem:[#allocation0]]
  $region34: #{tpu_custom_call.1} parent=0
    _
  %s6 = ssub.s32 1, %s4
  %s7 = scalar_select 0, %s6, %s4
  $region1: #{tpu_custom_call.1} parent=0
    #allocation2 [shape = 'u8[512]{0}', space=vmem, size = 0x400, scoped, tag = 'input window, operand 0, single buffered']
    #allocation3 [shape = 's32[1]{0}', space=sflag, size = 0x4, scoped, tag = 'scoped memory for tpu_custom_call.1']
    #allocation4 [shape = 's32[1]{0}', space=sflag, size = 0x4, scoped, tag = 'scoped memory for tpu_custom_call.1']
    #allocation5 [shape = 'u8[262144]{0}', space=vmem, size = 0x40000, scoped, tag = 'input window, operand 1, single buffered']
    #allocation6 [shape = 's32[1]{0}', space=sflag, size = 0x4, scoped, tag = 'scoped memory for tpu_custom_call.1']
    #allocation7 [shape = 'u8[262144]{0}', space=vmem, size = 0x40000, scoped, tag = 'input window, operand 2, single buffered']
    #allocation8 [shape = 'u8[262144]{0}', space=vmem, size = 0x40000, scoped, tag = 'output window, operand 0, single buffered']
    %8 = vsyncpa [#allocation3], 0
    %9 = vsyncpa [#allocation6], 0
    %10 = vsyncpa [#allocation4], 0
    // Predicated region
    $region2: #{tpu_custom_call.1} parent=1 // pred_check
      _
    $region3: #{tpu_custom_call.1} parent=1 // pred_check_branch
      %12 = sbr.rel (0) target = $region5
    $region4: #{tpu_custom_call.1} parent=1 // pred_region
      %14 = vsyncadd [#allocation3], 0
      %s16 = sshll.u32 %s0, 4
      %s17 = int_to_ptr.hbm [resolvable:$true] %s16
      %s18 = sshll.u32 [#allocation2], 4
      %s19 = int_to_ptr.vmem [resolvable:$true] %s18
      %21 = dma.hbm_to_vmem [thread:$0]  %s17, 16, %s19, [#allocation3]
    $region5: #{tpu_custom_call.1} parent=1 // pred_fallthru
      _
    // Predicated region
    $region6: #{tpu_custom_call.1} parent=1 // pred_check
      _
    $region7: #{tpu_custom_call.1} parent=1 // pred_check_branch
      %23 = sbr.rel (0) target = $region9
    $region8: #{tpu_custom_call.1} parent=1 // pred_region
      %25 = vsyncadd [#allocation6], 0
      %s26 = sshll.u32 %s1, 4
      %s27 = int_to_ptr.hbm [resolvable:$true] %s26
      %s28 = sshll.u32 [#allocation5], 4
      %s29 = int_to_ptr.vmem [resolvable:$true] %s28
      %34 = dma.hbm_to_vmem [thread:$0]  %s27, 8192, %s29, [#allocation6], 128, 128, 8
    $region9: #{tpu_custom_call.1} parent=1 // pred_fallthru
      _
    // Predicated region
    $region10: #{tpu_custom_call.1} parent=1 // pred_check
      _
    $region11: #{tpu_custom_call.1} parent=1 // pred_check_branch
      %36 = sbr.rel (0) target = $region13
    $region12: #{tpu_custom_call.1} parent=1 // pred_region
      %38 = vsyncadd [#allocation6], 0
      %s39 = sshll.u32 %s2, 4
      %s40 = int_to_ptr.hbm [resolvable:$true] %s39
      %s41 = sshll.u32 [#allocation7], 4
      %s42 = int_to_ptr.vmem [resolvable:$true] %s41
      %47 = dma.hbm_to_vmem [thread:$0]  %s40, 8192, %s42, [#allocation6], 128, 128, 8
    $region13: #{tpu_custom_call.1} parent=1 // pred_fallthru
      _
    // Predicated region
    $region14: #{tpu_custom_call.1} parent=1 // pred_check
      _
    $region15: #{tpu_custom_call.1} parent=1 // pred_check_branch
      %49 = sbr.rel (0) target = $region17
    $region16: #{tpu_custom_call.1} parent=1 // pred_region
      %51 = dma.done [#allocation3], 16
    $region17: #{tpu_custom_call.1} parent=1 // pred_fallthru
      _
    // Predicated region
    $region18: #{tpu_custom_call.1} parent=1 // pred_check
      _
    $region19: #{tpu_custom_call.1} parent=1 // pred_check_branch
      %53 = sbr.rel (0) target = $region21
    $region20: #{tpu_custom_call.1} parent=1 // pred_region
      %55 = dma.done [#allocation6], 8192
    $region21: #{tpu_custom_call.1} parent=1 // pred_fallthru
      _
    // Predicated region
    $region22: #{tpu_custom_call.1} parent=1 // pred_check
      _
    $region23: #{tpu_custom_call.1} parent=1 // pred_check_branch
      %57 = sbr.rel (0) target = $region25
    $region24: #{tpu_custom_call.1} parent=1 // pred_region
      %59 = dma.done [#allocation6], 8192
    $region25: #{tpu_custom_call.1} parent=1 // pred_fallthru
      _
    %s60 = smul.u32 0, 512
    %s61 = scvt.s32.f32 %s60
    %v62 = vld [vmem:[#allocation2] sm:$0x1]
    %v63 = vstv %s61
    %v64 = vmul.f32 %v63, %v62
    %v65 = vand.u32 2147483647, %v64
    %vm66 = vcmp.le.f32.partialorder %v65, 0.7853982
    %vm67 = vcmp.lt.s32.totalorder %v64, 0
    %v68 = vand.u32 %v64, 2139095040
    %v69 = vshrl.u32 %v68, 23
    %v70 = vsub.s32 %v69, 127
    %v71 = vand.u32 2147483647, %v64
    %v72 = vand.u32 %v71, 8388607
    %v73 = vor.u32 %v72, 8388608
    %v74 = vsub.s32 0, %v73
    %v75 = vadd.s32 %v70, 1
    %vm76 = vcmp.gt.s32.totalorder %v75, 0
    %v77 = vsel %vm76, %v75, 0
    %v78 = vshrl.u32 %v77, 5
    %v79 = vand.u32 %v77, 31
    %v80 = vsub.s32 32, %v79
    %v81 = vshrl.u32 683565275, %v80
    %v82 = vshll.u32 683565275, %v79
    %v83 = vshrl.u32 2475754826, %v80
    %v84 = vor.u32 %v82, %v83
    %v85 = vshll.u32 2475754826, %v79
    %v86 = vshrl.u32 2131351028, %v80
    %v87 = vor.u32 %v85, %v86
    %v88 = vshll.u32 2131351028, %v79
    %v89 = vshrl.u32 2102212464, %v80
    %v90 = vor.u32 %v88, %v89
    %v91 = vshll.u32 2102212464, %v79
    %v92 = vshrl.u32 920167782, %v80
    %v93 = vor.u32 %v91, %v92
    %v94 = vshll.u32 920167782, %v79
    %v95 = vshrl.u32 1326507024, %v80
    %v96 = vor.u32 %v94, %v95
    %vm97 = vcmp.lt.s32.totalorder %v78, 1
    %vm98 = vcmp.lt.s32.totalorder %v78, 2
    %vm99 = vcmp.lt.s32.totalorder %v78, 3
    %vm100 = vcmp.lt.s32.totalorder %v78, 4
    %v101 = vsel %vm97, %v81, %v84
    %v102 = vsel %vm100, %v90, 2102212464
    %v103 = vsel %vm99, %v87, %v102
    %v104 = vsel %vm98, %v101, %v103
    %v105 = vsel %vm97, %v84, %v87
    %v106 = vsel %vm100, %v93, 920167782
    %v107 = vsel %vm99, %v90, %v106
    %v108 = vsel %vm98, %v105, %v107
    %v109 = vsel %vm97, %v87, %v90
    %v110 = vsel %vm100, %v96, 1326507024
    %v111 = vsel %vm99, %v93, %v110
    %v112 = vsel %vm98, %v109, %v111
    %v113 = vshll.u32 %v73, 8
    %v114 = vand.u32 %v113, 65535
    %v115 = vshrl.u32 %v113, 16
    %v116 = vand.u32 %v112, 65535
    %v117 = vshrl.u32 %v112, 16
    %v118 = vmul.u32 %v114, %v116
    %v119 = vmul.u32 %v114, %v117
    %v120 = vmul.u32 %v115, %v116
    %v121 = vmul.u32 %v115, %v117
    %v122 = vshll.u32 %v119, 16
    %v123 = vshrl.u32 %v119, 16
    %v124 = vshll.u32 %v120, 16
    %v125 = vshrl.u32 %v120, 16
    %vm126 = vc.u32 %v118, %v122
    %v127 = vsel %vm126, 1, 0
    %v128 = vadd.s32 %v118, %v122
    %v129 = vadd.s32 %v121, %v127
    %vm130 = vc.u32 %v128, %v124
    %v131 = vsel %vm130, 1, 0
    %v132 = vadd.s32 %v128, %v124
    %v133 = vadd.s32 %v129, %v131
    %v134 = vadd.s32 %v133, %v123
    %v135 = vadd.s32 %v134, %v125
    %v136 = vand.u32 %v113, 65535
    %v137 = vshrl.u32 %v113, 16
    %v138 = vand.u32 %v108, 65535
    %v139 = vshrl.u32 %v108, 16
    %v140 = vmul.u32 %v136, %v138
    %v141 = vmul.u32 %v136, %v139
    %v142 = vmul.u32 %v137, %v138
    %v143 = vmul.u32 %v137, %v139
    %v144 = vshll.u32 %v141, 16
    %v145 = vshrl.u32 %v141, 16
    %v146 = vshll.u32 %v142, 16
    %v147 = vshrl.u32 %v142, 16
    %vm148 = vc.u32 %v140, %v144
    %v149 = vsel %vm148, 1, 0
    %v150 = vadd.s32 %v140, %v144
    %v151 = vadd.s32 %v143, %v149
    %vm152 = vc.u32 %v150, %v146
    %v153 = vsel %vm152, 1, 0
    %v154 = vadd.s32 %v150, %v146
    %v155 = vadd.s32 %v151, %v153
    %v156 = vadd.s32 %v155, %v145
    %v157 = vadd.s32 %v156, %v147
    %v158 = vmul.u32 %v113, %v104
    %v159 = vadd.s32 %v135, %v154
    %vm160 = vc.u32 %v135, %v154
    %v161 = vadd.s32 %v157, 1
    %v162 = vsel %vm160, %v161, %v157
    %v163 = vadd.s32 %v158, %v162
    %v164 = vadd.s32 %v163, 536870912
    %v165 = vshrl.u32 %v164, 30
    %v166 = vshll.u32 %v165, 30
    %v167 = vsub.s32 %v163, %v166
    %vm168 = vcmp.lt.s32.totalorder %v167, 0
    %v169 = vsub.s32 0, %v167
    %v170 = vsel %vm168, %v169, %v167
    %v171 = vclz %v170
    %v172 = vsub.s32 %v171, 2
    %vm173 = vcmp.gt.s32.totalorder 0, %v172
    %v174 = vsel %vm173, 0, %v172
    %v175 = vsub.s32 32, %v174
    %v176 = vshll.u32 %v167, %v174
    %v177 = vshrl.u32 %v159, %v175
    %v178 = vor.u32 %v176, %v177
    %v179 = vsub.s32 4294967266, %v174
    %v180 = vadd.s32 %v179, 127
    %v181 = vshll.u32 %v180, 23
    %v182 = vor.u32 4788187, %v181
    %v183 = vand.u32 2147483647, %v182
    %v185 = vcvt.s32.f32 %v178
    %v186 = vmul.f32 %v185, %v183
    %v187 = vxor.u32 %v186, 2147483648
    %v188 = vsel %vm67, %v187, %v186
    %v189 = vsub.s32 4, %v165
    %v190 = vsel %vm67, %v189, %v165
    %v191 = vsel %vm66, %v64, %v188
    %v192 = vsel %vm66, 0, %v190
    %v193 = vmul.f32 %v191, %v191
    %v194 = vmul.f32 %v193, -0.001358992
    %v195 = vadd.f32 %v194, 0.041655596
    %v196 = vmul.f32 %v193, %v195
    %v197 = vadd.f32 %v196, -0.4999988
    %v198 = vmul.f32 %v193, %v197
    %v199 = vadd.f32 1.0, %v198
    %v200 = vmul.f32 %v191, %v191
    %v201 = vmul.f32 %v200, -0.00019511016
    %v202 = vadd.f32 %v201, 0.008332121
    %v203 = vmul.f32 %v200, %v202
    %v204 = vadd.f32 %v203, -0.16666654
    %v205 = vmul.f32 %v200, %v204
    %v206 = vadd.f32 %v205, 1.0
    %v207 = vmul.f32 %v206, %v191
    %vm208 = vweird.f32 %v64
    %v209 = vadd.s32 %v192, 3
    %v210 = vand.u32 %v209, 3
    %vm211 = vcmp.lt.s32.totalorder %v210, 2
    %vm212 = vcmp.eq.s32.totalorder %v210, 0
    %v213 = vxor.u32 %v207, 2147483648
    %v214 = vsel %vm212, %v199, %v213
    %vm215 = vcmp.eq.s32.totalorder %v210, 2
    %v216 = vxor.u32 %v199, 2147483648
    %v217 = vsel %vm215, %v216, %v207
    %v218 = vsel %vm211, %v214, %v217
    %v219 = vsel %vm208, nan, %v218
    %v220 = vand.u32 2147483647, %v64
    %vm221 = vcmp.le.f32.partialorder %v220, 0.7853982
    %vm222 = vcmp.lt.s32.totalorder %v64, 0
    %v223 = vand.u32 %v64, 2139095040
    %v224 = vshrl.u32 %v223, 23
    %v225 = vsub.s32 %v224, 127
    %v226 = vand.u32 2147483647, %v64
    %v227 = vand.u32 %v226, 8388607
    %v228 = vor.u32 %v227, 8388608
    %v229 = vsub.s32 0, %v228
    %v230 = vadd.s32 %v225, 1
    %vm231 = vcmp.gt.s32.totalorder %v230, 0
    %v232 = vsel %vm231, %v230, 0
    %v233 = vshrl.u32 %v232, 5
    %v234 = vand.u32 %v232, 31
    %v235 = vsub.s32 32, %v234
    %v236 = vshrl.u32 683565275, %v235
    %v237 = vshll.u32 683565275, %v234
    %v238 = vshrl.u32 2475754826, %v235
    %v239 = vor.u32 %v237, %v238
    %v240 = vshll.u32 2475754826, %v234
    %v241 = vshrl.u32 2131351028, %v235
    %v242 = vor.u32 %v240, %v241
    %v243 = vshll.u32 2131351028, %v234
    %v244 = vshrl.u32 2102212464, %v235
    %v245 = vor.u32 %v243, %v244
    %v246 = vshll.u32 2102212464, %v234
    %v247 = vshrl.u32 920167782, %v235
    %v248 = vor.u32 %v246, %v247
    %v249 = vshll.u32 920167782, %v234
    %v250 = vshrl.u32 1326507024, %v235
    %v251 = vor.u32 %v249, %v250
    %vm252 = vcmp.lt.s32.totalorder %v233, 1
    %vm253 = vcmp.lt.s32.totalorder %v233, 2
    %vm254 = vcmp.lt.s32.totalorder %v233, 3
    %vm255 = vcmp.lt.s32.totalorder %v233, 4
    %v256 = vsel %vm252, %v236, %v239
    %v257 = vsel %vm255, %v245, 2102212464
    %v258 = vsel %vm254, %v242, %v257
    %v259 = vsel %vm253, %v256, %v258
    %v260 = vsel %vm252, %v239, %v242
    %v261 = vsel %vm255, %v248, 920167782
    %v262 = vsel %vm254, %v245, %v261
    %v263 = vsel %vm253, %v260, %v262
    %v264 = vsel %vm252, %v242, %v245
    %v265 = vsel %vm255, %v251, 1326507024
    %v266 = vsel %vm254, %v248, %v265
    %v267 = vsel %vm253, %v264, %v266
    %v268 = vshll.u32 %v228, 8
    %v269 = vand.u32 %v268, 65535
    %v270 = vshrl.u32 %v268, 16
    %v271 = vand.u32 %v267, 65535
    %v272 = vshrl.u32 %v267, 16
    %v273 = vmul.u32 %v269, %v271
    %v274 = vmul.u32 %v269, %v272
    %v275 = vmul.u32 %v270, %v271
    %v276 = vmul.u32 %v270, %v272
    %v277 = vshll.u32 %v274, 16
    %v278 = vshrl.u32 %v274, 16
    %v279 = vshll.u32 %v275, 16
    %v280 = vshrl.u32 %v275, 16
    %vm281 = vc.u32 %v273, %v277
    %v282 = vsel %vm281, 1, 0
    %v283 = vadd.s32 %v273, %v277
    %v284 = vadd.s32 %v276, %v282
    %vm285 = vc.u32 %v283, %v279
    %v286 = vsel %vm285, 1, 0
    %v287 = vadd.s32 %v283, %v279
    %v288 = vadd.s32 %v284, %v286
    %v289 = vadd.s32 %v288, %v278
    %v290 = vadd.s32 %v289, %v280
    %v291 = vand.u32 %v268, 65535
    %v292 = vshrl.u32 %v268, 16
    %v293 = vand.u32 %v263, 65535
    %v294 = vshrl.u32 %v263, 16
    %v295 = vmul.u32 %v291, %v293
    %v296 = vmul.u32 %v291, %v294
    %v297 = vmul.u32 %v292, %v293
    %v298 = vmul.u32 %v292, %v294
    %v299 = vshll.u32 %v296, 16
    %v300 = vshrl.u32 %v296, 16
    %v301 = vshll.u32 %v297, 16
    %v302 = vshrl.u32 %v297, 16
    %vm303 = vc.u32 %v295, %v299
    %v304 = vsel %vm303, 1, 0
    %v305 = vadd.s32 %v295, %v299
    %v306 = vadd.s32 %v298, %v304
    %vm307 = vc.u32 %v305, %v301
    %v308 = vsel %vm307, 1, 0
    %v309 = vadd.s32 %v305, %v301
    %v310 = vadd.s32 %v306, %v308
    %v311 = vadd.s32 %v310, %v300
    %v312 = vadd.s32 %v311, %v302
    %v313 = vmul.u32 %v268, %v259
    %v314 = vadd.s32 %v290, %v309
    %vm315 = vc.u32 %v290, %v309
    %v316 = vadd.s32 %v312, 1
    %v317 = vsel %vm315, %v316, %v312
    %v318 = vadd.s32 %v313, %v317
    %v319 = vadd.s32 %v318, 536870912
    %v320 = vshrl.u32 %v319, 30
    %v321 = vshll.u32 %v320, 30
    %v322 = vsub.s32 %v318, %v321
    %vm323 = vcmp.lt.s32.totalorder %v322, 0
    %v324 = vsub.s32 0, %v322
    %v325 = vsel %vm323, %v324, %v322
    %v326 = vclz %v325
    %v327 = vsub.s32 %v326, 2
    %vm328 = vcmp.gt.s32.totalorder 0, %v327
    %v329 = vsel %vm328, 0, %v327
    %v330 = vsub.s32 32, %v329
    %v331 = vshll.u32 %v322, %v329
    %v332 = vshrl.u32 %v314, %v330
    %v333 = vor.u32 %v331, %v332
    %v334 = vsub.s32 4294967266, %v329
    %v335 = vadd.s32 %v334, 127
    %v336 = vshll.u32 %v335, 23
    %v337 = vor.u32 4788187, %v336
    %v338 = vand.u32 2147483647, %v337
    %v340 = vcvt.s32.f32 %v333
    %v341 = vmul.f32 %v340, %v338
    %v342 = vxor.u32 %v341, 2147483648
    %v343 = vsel %vm222, %v342, %v341
    %v344 = vsub.s32 4, %v320
    %v345 = vsel %vm222, %v344, %v320
    %v346 = vsel %vm221, %v64, %v343
    %v347 = vsel %vm221, 0, %v345
    %v348 = vmul.f32 %v346, %v346
    %v349 = vmul.f32 %v348, -0.001358992
    %v350 = vadd.f32 %v349, 0.041655596
    %v351 = vmul.f32 %v348, %v350
    %v352 = vadd.f32 %v351, -0.4999988
    %v353 = vmul.f32 %v348, %v352
    %v354 = vadd.f32 1.0, %v353
    %v355 = vmul.f32 %v346, %v346
    %v356 = vmul.f32 %v355, -0.00019511016
    %v357 = vadd.f32 %v356, 0.008332121
    %v358 = vmul.f32 %v355, %v357
    %v359 = vadd.f32 %v358, -0.16666654
    %v360 = vmul.f32 %v355, %v359
    %v361 = vadd.f32 %v360, 1.0
    %v362 = vmul.f32 %v361, %v346
    %vm363 = vweird.f32 %v64
    %v364 = vand.u32 %v347, 3
    %vm365 = vcmp.lt.s32.totalorder %v364, 2
    %vm366 = vcmp.eq.s32.totalorder %v364, 0
    %v367 = vxor.u32 %v362, 2147483648
    %v368 = vsel %vm366, %v354, %v367
    %vm369 = vcmp.eq.s32.totalorder %v364, 2
    %v370 = vxor.u32 %v354, 2147483648
    %v371 = vsel %vm369, %v370, %v362
    %v372 = vsel %vm365, %v368, %v371
    %v373 = vsel %vm363, nan, %v372
    %v374 = vld [vmem:[#allocation5] sm:$0xff]
    %v375 = vld [vmem:[#allocation5 + $0x8] sm:$0xff]
    %v376 = vld [vmem:[#allocation5 + $0x10] sm:$0xff]
    %v377 = vld [vmem:[#allocation5 + $0x18] sm:$0xff]
    %v378 = vld [vmem:[#allocation5 + $0x20] sm:$0xff]
    %v379 = vld [vmem:[#allocation5 + $0x28] sm:$0xff]
    %v380 = vld [vmem:[#allocation5 + $0x30] sm:$0xff]
    %v381 = vld [vmem:[#allocation5 + $0x38] sm:$0xff]
    %v382 = vld [vmem:[#allocation5 + $0x40] sm:$0xff]
    %v383 = vld [vmem:[#allocation5 + $0x48] sm:$0xff]
    %v384 = vld [vmem:[#allocation5 + $0x50] sm:$0xff]
    %v385 = vld [vmem:[#allocation5 + $0x58] sm:$0xff]
    %v386 = vld [vmem:[#allocation5 + $0x60] sm:$0xff]
    %v387 = vld [vmem:[#allocation5 + $0x68] sm:$0xff]
    %v388 = vld [vmem:[#allocation5 + $0x70] sm:$0xff]
    %v389 = vld [vmem:[#allocation5 + $0x78] sm:$0xff]
    %v390 = vld [vmem:[#allocation5 + $0x80] sm:$0xff]
    %v391 = vld [vmem:[#allocation5 + $0x88] sm:$0xff]
    %v392 = vld [vmem:[#allocation5 + $0x90] sm:$0xff]
    %v393 = vld [vmem:[#allocation5 + $0x98] sm:$0xff]
    %v394 = vld [vmem:[#allocation5 + $0xa0] sm:$0xff]
    %v395 = vld [vmem:[#allocation5 + $0xa8] sm:$0xff]
    %v396 = vld [vmem:[#allocation5 + $0xb0] sm:$0xff]
    %v397 = vld [vmem:[#allocation5 + $0xb8] sm:$0xff]
    %v398 = vld [vmem:[#allocation5 + $0xc0] sm:$0xff]
    %v399 = vld [vmem:[#allocation5 + $0xc8] sm:$0xff]
    %v400 = vld [vmem:[#allocation5 + $0xd0] sm:$0xff]
    %v401 = vld [vmem:[#allocation5 + $0xd8] sm:$0xff]
    %v402 = vld [vmem:[#allocation5 + $0xe0] sm:$0xff]
    %v403 = vld [vmem:[#allocation5 + $0xe8] sm:$0xff]
    %v404 = vld [vmem:[#allocation5 + $0xf0] sm:$0xff]
    %v405 = vld [vmem:[#allocation5 + $0xf8] sm:$0xff]
    %v406 = vld [vmem:[#allocation5 + $0x100] sm:$0xff]
    %v407 = vld [vmem:[#allocation5 + $0x108] sm:$0xff]
    %v408 = vld [vmem:[#allocation5 + $0x110] sm:$0xff]
    %v409 = vld [vmem:[#allocation5 + $0x118] sm:$0xff]
    %v410 = vld [vmem:[#allocation5 + $0x120] sm:$0xff]
    %v411 = vld [vmem:[#allocation5 + $0x128] sm:$0xff]
    %v412 = vld [vmem:[#allocation5 + $0x130] sm:$0xff]
    %v413 = vld [vmem:[#allocation5 + $0x138] sm:$0xff]
    %v414 = vld [vmem:[#allocation5 + $0x140] sm:$0xff]
    %v415 = vld [vmem:[#allocation5 + $0x148] sm:$0xff]
    %v416 = vld [vmem:[#allocation5 + $0x150] sm:$0xff]
    %v417 = vld [vmem:[#allocation5 + $0x158] sm:$0xff]
    %v418 = vld [vmem:[#allocation5 + $0x160] sm:$0xff]
    %v419 = vld [vmem:[#allocation5 + $0x168] sm:$0xff]
    %v420 = vld [vmem:[#allocation5 + $0x170] sm:$0xff]
    %v421 = vld [vmem:[#allocation5 + $0x178] sm:$0xff]
    %v422 = vld [vmem:[#allocation5 + $0x180] sm:$0xff]
    %v423 = vld [vmem:[#allocation5 + $0x188] sm:$0xff]
    %v424 = vld [vmem:[#allocation5 + $0x190] sm:$0xff]
    %v425 = vld [vmem:[#allocation5 + $0x198] sm:$0xff]
    %v426 = vld [vmem:[#allocation5 + $0x1a0] sm:$0xff]
    %v427 = vld [vmem:[#allocation5 + $0x1a8] sm:$0xff]
    %v428 = vld [vmem:[#allocation5 + $0x1b0] sm:$0xff]
    %v429 = vld [vmem:[#allocation5 + $0x1b8] sm:$0xff]
    %v430 = vld [vmem:[#allocation5 + $0x1c0] sm:$0xff]
    %v431 = vld [vmem:[#allocation5 + $0x1c8] sm:$0xff]
    %v432 = vld [vmem:[#allocation5 + $0x1d0] sm:$0xff]
    %v433 = vld [vmem:[#allocation5 + $0x1d8] sm:$0xff]
    %v434 = vld [vmem:[#allocation5 + $0x1e0] sm:$0xff]
    %v435 = vld [vmem:[#allocation5 + $0x1e8] sm:$0xff]
    %v436 = vld [vmem:[#allocation5 + $0x1f0] sm:$0xff]
    %v437 = vld [vmem:[#allocation5 + $0x1f8] sm:$0xff]
    %v439 = vperm.slane %v219, 0
    %v441 = vmul.f32 %v439, %v374
    %v442 = vmul.f32 %v439, %v375
    %v443 = vmul.f32 %v439, %v376
    %v444 = vmul.f32 %v439, %v377
    %v445 = vmul.f32 %v439, %v378
    %v446 = vmul.f32 %v439, %v379
    %v447 = vmul.f32 %v439, %v380
    %v448 = vmul.f32 %v439, %v381
    %v449 = vmul.f32 %v439, %v382
    %v450 = vmul.f32 %v439, %v383
    %v451 = vmul.f32 %v439, %v384
    %v452 = vmul.f32 %v439, %v385
    %v453 = vmul.f32 %v439, %v386
    %v454 = vmul.f32 %v439, %v387
    %v455 = vmul.f32 %v439, %v388
    %v456 = vmul.f32 %v439, %v389
    %v457 = vmul.f32 %v439, %v390
    %v458 = vmul.f32 %v439, %v391
    %v459 = vmul.f32 %v439, %v392
    %v460 = vmul.f32 %v439, %v393
    %v461 = vmul.f32 %v439, %v394
    %v462 = vmul.f32 %v439, %v395
    %v463 = vmul.f32 %v439, %v396
    %v464 = vmul.f32 %v439, %v397
    %v465 = vmul.f32 %v439, %v398
    %v466 = vmul.f32 %v439, %v399
    %v467 = vmul.f32 %v439, %v400
    %v468 = vmul.f32 %v439, %v401
    %v469 = vmul.f32 %v439, %v402
    %v470 = vmul.f32 %v439, %v403
    %v471 = vmul.f32 %v439, %v404
    %v472 = vmul.f32 %v439, %v405
    %v473 = vmul.f32 %v439, %v406
    %v474 = vmul.f32 %v439, %v407
    %v475 = vmul.f32 %v439, %v408
    %v476 = vmul.f32 %v439, %v409
    %v477 = vmul.f32 %v439, %v410
    %v478 = vmul.f32 %v439, %v411
    %v479 = vmul.f32 %v439, %v412
    %v480 = vmul.f32 %v439, %v413
    %v481 = vmul.f32 %v439, %v414
    %v482 = vmul.f32 %v439, %v415
    %v483 = vmul.f32 %v439, %v416
    %v484 = vmul.f32 %v439, %v417
    %v485 = vmul.f32 %v439, %v418
    %v486 = vmul.f32 %v439, %v419
    %v487 = vmul.f32 %v439, %v420
    %v488 = vmul.f32 %v439, %v421
    %v489 = vmul.f32 %v439, %v422
    %v490 = vmul.f32 %v439, %v423
    %v491 = vmul.f32 %v439, %v424
    %v492 = vmul.f32 %v439, %v425
    %v493 = vmul.f32 %v439, %v426
    %v494 = vmul.f32 %v439, %v427
    %v495 = vmul.f32 %v439, %v428
    %v496 = vmul.f32 %v439, %v429
    %v497 = vmul.f32 %v439, %v430
    %v498 = vmul.f32 %v439, %v431
    %v499 = vmul.f32 %v439, %v432
    %v500 = vmul.f32 %v439, %v433
    %v501 = vmul.f32 %v439, %v434
    %v502 = vmul.f32 %v439, %v435
    %v503 = vmul.f32 %v439, %v436
    %v504 = vmul.f32 %v439, %v437
    %v505 = vld [vmem:[#allocation7] sm:$0xff]
    %v506 = vld [vmem:[#allocation7 + $0x8] sm:$0xff]
    %v507 = vld [vmem:[#allocation7 + $0x10] sm:$0xff]
    %v508 = vld [vmem:[#allocation7 + $0x18] sm:$0xff]
    %v509 = vld [vmem:[#allocation7 + $0x20] sm:$0xff]
    %v510 = vld [vmem:[#allocation7 + $0x28] sm:$0xff]
    %v511 = vld [vmem:[#allocation7 + $0x30] sm:$0xff]
    %v512 = vld [vmem:[#allocation7 + $0x38] sm:$0xff]
    %v513 = vld [vmem:[#allocation7 + $0x40] sm:$0xff]
    %v514 = vld [vmem:[#allocation7 + $0x48] sm:$0xff]
    %v515 = vld [vmem:[#allocation7 + $0x50] sm:$0xff]
    %v516 = vld [vmem:[#allocation7 + $0x58] sm:$0xff]
    %v517 = vld [vmem:[#allocation7 + $0x60] sm:$0xff]
    %v518 = vld [vmem:[#allocation7 + $0x68] sm:$0xff]
    %v519 = vld [vmem:[#allocation7 + $0x70] sm:$0xff]
    %v520 = vld [vmem:[#allocation7 + $0x78] sm:$0xff]
    %v521 = vld [vmem:[#allocation7 + $0x80] sm:$0xff]
    %v522 = vld [vmem:[#allocation7 + $0x88] sm:$0xff]
    %v523 = vld [vmem:[#allocation7 + $0x90] sm:$0xff]
    %v524 = vld [vmem:[#allocation7 + $0x98] sm:$0xff]
    %v525 = vld [vmem:[#allocation7 + $0xa0] sm:$0xff]
    %v526 = vld [vmem:[#allocation7 + $0xa8] sm:$0xff]
    %v527 = vld [vmem:[#allocation7 + $0xb0] sm:$0xff]
    %v528 = vld [vmem:[#allocation7 + $0xb8] sm:$0xff]
    %v529 = vld [vmem:[#allocation7 + $0xc0] sm:$0xff]
    %v530 = vld [vmem:[#allocation7 + $0xc8] sm:$0xff]
    %v531 = vld [vmem:[#allocation7 + $0xd0] sm:$0xff]
    %v532 = vld [vmem:[#allocation7 + $0xd8] sm:$0xff]
    %v533 = vld [vmem:[#allocation7 + $0xe0] sm:$0xff]
    %v534 = vld [vmem:[#allocation7 + $0xe8] sm:$0xff]
    %v535 = vld [vmem:[#allocation7 + $0xf0] sm:$0xff]
    %v536 = vld [vmem:[#allocation7 + $0xf8] sm:$0xff]
    %v537 = vld [vmem:[#allocation7 + $0x100] sm:$0xff]
    %v538 = vld [vmem:[#allocation7 + $0x108] sm:$0xff]
    %v539 = vld [vmem:[#allocation7 + $0x110] sm:$0xff]
    %v540 = vld [vmem:[#allocation7 + $0x118] sm:$0xff]
    %v541 = vld [vmem:[#allocation7 + $0x120] sm:$0xff]
    %v542 = vld [vmem:[#allocation7 + $0x128] sm:$0xff]
    %v543 = vld [vmem:[#allocation7 + $0x130] sm:$0xff]
    %v544 = vld [vmem:[#allocation7 + $0x138] sm:$0xff]
    %v545 = vld [vmem:[#allocation7 + $0x140] sm:$0xff]
    %v546 = vld [vmem:[#allocation7 + $0x148] sm:$0xff]
    %v547 = vld [vmem:[#allocation7 + $0x150] sm:$0xff]
    %v548 = vld [vmem:[#allocation7 + $0x158] sm:$0xff]
    %v549 = vld [vmem:[#allocation7 + $0x160] sm:$0xff]
    %v550 = vld [vmem:[#allocation7 + $0x168] sm:$0xff]
    %v551 = vld [vmem:[#allocation7 + $0x170] sm:$0xff]
    %v552 = vld [vmem:[#allocation7 + $0x178] sm:$0xff]
    %v553 = vld [vmem:[#allocation7 + $0x180] sm:$0xff]
    %v554 = vld [vmem:[#allocation7 + $0x188] sm:$0xff]
    %v555 = vld [vmem:[#allocation7 + $0x190] sm:$0xff]
    %v556 = vld [vmem:[#allocation7 + $0x198] sm:$0xff]
    %v557 = vld [vmem:[#allocation7 + $0x1a0] sm:$0xff]
    %v558 = vld [vmem:[#allocation7 + $0x1a8] sm:$0xff]
    %v559 = vld [vmem:[#allocation7 + $0x1b0] sm:$0xff]
    %v560 = vld [vmem:[#allocation7 + $0x1b8] sm:$0xff]
    %v561 = vld [vmem:[#allocation7 + $0x1c0] sm:$0xff]
    %v562 = vld [vmem:[#allocation7 + $0x1c8] sm:$0xff]
    %v563 = vld [vmem:[#allocation7 + $0x1d0] sm:$0xff]
    %v564 = vld [vmem:[#allocation7 + $0x1d8] sm:$0xff]
    %v565 = vld [vmem:[#allocation7 + $0x1e0] sm:$0xff]
    %v566 = vld [vmem:[#allocation7 + $0x1e8] sm:$0xff]
    %v567 = vld [vmem:[#allocation7 + $0x1f0] sm:$0xff]
    %v568 = vld [vmem:[#allocation7 + $0x1f8] sm:$0xff]
    %v570 = vperm.slane %v373, 0
    %v572 = vmul.f32 %v570, %v505
    %v573 = vmul.f32 %v570, %v506
    %v574 = vmul.f32 %v570, %v507
    %v575 = vmul.f32 %v570, %v508
    %v576 = vmul.f32 %v570, %v509
    %v577 = vmul.f32 %v570, %v510
    %v578 = vmul.f32 %v570, %v511
    %v579 = vmul.f32 %v570, %v512
    %v580 = vmul.f32 %v570, %v513
    %v581 = vmul.f32 %v570, %v514
    %v582 = vmul.f32 %v570, %v515
    %v583 = vmul.f32 %v570, %v516
    %v584 = vmul.f32 %v570, %v517
    %v585 = vmul.f32 %v570, %v518
    %v586 = vmul.f32 %v570, %v519
    %v587 = vmul.f32 %v570, %v520
    %v588 = vmul.f32 %v570, %v521
    %v589 = vmul.f32 %v570, %v522
    %v590 = vmul.f32 %v570, %v523
    %v591 = vmul.f32 %v570, %v524
    %v592 = vmul.f32 %v570, %v525
    %v593 = vmul.f32 %v570, %v526
    %v594 = vmul.f32 %v570, %v527
    %v595 = vmul.f32 %v570, %v528
    %v596 = vmul.f32 %v570, %v529
    %v597 = vmul.f32 %v570, %v530
    %v598 = vmul.f32 %v570, %v531
    %v599 = vmul.f32 %v570, %v532
    %v600 = vmul.f32 %v570, %v533
    %v601 = vmul.f32 %v570, %v534
    %v602 = vmul.f32 %v570, %v535
    %v603 = vmul.f32 %v570, %v536
    %v604 = vmul.f32 %v570, %v537
    %v605 = vmul.f32 %v570, %v538
    %v606 = vmul.f32 %v570, %v539
    %v607 = vmul.f32 %v570, %v540
    %v608 = vmul.f32 %v570, %v541
    %v609 = vmul.f32 %v570, %v542
    %v610 = vmul.f32 %v570, %v543
    %v611 = vmul.f32 %v570, %v544
    %v612 = vmul.f32 %v570, %v545
    %v613 = vmul.f32 %v570, %v546
    %v614 = vmul.f32 %v570, %v547
    %v615 = vmul.f32 %v570, %v548
    %v616 = vmul.f32 %v570, %v549
    %v617 = vmul.f32 %v570, %v550
    %v618 = vmul.f32 %v570, %v551
    %v619 = vmul.f32 %v570, %v552
    %v620 = vmul.f32 %v570, %v553
    %v621 = vmul.f32 %v570, %v554
    %v622 = vmul.f32 %v570, %v555
    %v623 = vmul.f32 %v570, %v556
    %v624 = vmul.f32 %v570, %v557
    %v625 = vmul.f32 %v570, %v558
    %v626 = vmul.f32 %v570, %v559
    %v627 = vmul.f32 %v570, %v560
    %v628 = vmul.f32 %v570, %v561
    %v629 = vmul.f32 %v570, %v562
    %v630 = vmul.f32 %v570, %v563
    %v631 = vmul.f32 %v570, %v564
    %v632 = vmul.f32 %v570, %v565
    %v633 = vmul.f32 %v570, %v566
    %v634 = vmul.f32 %v570, %v567
    %v635 = vmul.f32 %v570, %v568
    %v636 = vadd.f32 %v441, %v572
    %v637 = vadd.f32 %v442, %v573
    %v638 = vadd.f32 %v443, %v574
    %v639 = vadd.f32 %v444, %v575
    %v640 = vadd.f32 %v445, %v576
    %v641 = vadd.f32 %v446, %v577
    %v642 = vadd.f32 %v447, %v578
    %v643 = vadd.f32 %v448, %v579
    %v644 = vadd.f32 %v449, %v580
    %v645 = vadd.f32 %v450, %v581
    %v646 = vadd.f32 %v451, %v582
    %v647 = vadd.f32 %v452, %v583
    %v648 = vadd.f32 %v453, %v584
    %v649 = vadd.f32 %v454, %v585
    %v650 = vadd.f32 %v455, %v586
    %v651 = vadd.f32 %v456, %v587
    %v652 = vadd.f32 %v457, %v588
    %v653 = vadd.f32 %v458, %v589
    %v654 = vadd.f32 %v459, %v590
    %v655 = vadd.f32 %v460, %v591
    %v656 = vadd.f32 %v461, %v592
    %v657 = vadd.f32 %v462, %v593
    %v658 = vadd.f32 %v463, %v594
    %v659 = vadd.f32 %v464, %v595
    %v660 = vadd.f32 %v465, %v596
    %v661 = vadd.f32 %v466, %v597
    %v662 = vadd.f32 %v467, %v598
    %v663 = vadd.f32 %v468, %v599
    %v664 = vadd.f32 %v469, %v600
    %v665 = vadd.f32 %v470, %v601
    %v666 = vadd.f32 %v471, %v602
    %v667 = vadd.f32 %v472, %v603
    %v668 = vadd.f32 %v473, %v604
    %v669 = vadd.f32 %v474, %v605
    %v670 = vadd.f32 %v475, %v606
    %v671 = vadd.f32 %v476, %v607
    %v672 = vadd.f32 %v477, %v608
    %v673 = vadd.f32 %v478, %v609
    %v674 = vadd.f32 %v479, %v610
    %v675 = vadd.f32 %v480, %v611
    %v676 = vadd.f32 %v481, %v612
    %v677 = vadd.f32 %v482, %v613
    %v678 = vadd.f32 %v483, %v614
    %v679 = vadd.f32 %v484, %v615
    %v680 = vadd.f32 %v485, %v616
    %v681 = vadd.f32 %v486, %v617
    %v682 = vadd.f32 %v487, %v618
    %v683 = vadd.f32 %v488, %v619
    %v684 = vadd.f32 %v489, %v620
    %v685 = vadd.f32 %v490, %v621
    %v686 = vadd.f32 %v491, %v622
    %v687 = vadd.f32 %v492, %v623
    %v688 = vadd.f32 %v493, %v624
    %v689 = vadd.f32 %v494, %v625
    %v690 = vadd.f32 %v495, %v626
    %v691 = vadd.f32 %v496, %v627
    %v692 = vadd.f32 %v497, %v628
    %v693 = vadd.f32 %v498, %v629
    %v694 = vadd.f32 %v499, %v630
    %v695 = vadd.f32 %v500, %v631
    %v696 = vadd.f32 %v501, %v632
    %v697 = vadd.f32 %v502, %v633
    %v698 = vadd.f32 %v503, %v634
    %v699 = vadd.f32 %v504, %v635
    %700 = vst [vmem:[#allocation8] sm:$0xff] %v636
    %701 = vst [vmem:[#allocation8 + $0x8] sm:$0xff] %v637
    %702 = vst [vmem:[#allocation8 + $0x10] sm:$0xff] %v638
    %703 = vst [vmem:[#allocation8 + $0x18] sm:$0xff] %v639
    %704 = vst [vmem:[#allocation8 + $0x20] sm:$0xff] %v640
    %705 = vst [vmem:[#allocation8 + $0x28] sm:$0xff] %v641
    %706 = vst [vmem:[#allocation8 + $0x30] sm:$0xff] %v642
    %707 = vst [vmem:[#allocation8 + $0x38] sm:$0xff] %v643
    %708 = vst [vmem:[#allocation8 + $0x40] sm:$0xff] %v644
    %709 = vst [vmem:[#allocation8 + $0x48] sm:$0xff] %v645
    %710 = vst [vmem:[#allocation8 + $0x50] sm:$0xff] %v646
    %711 = vst [vmem:[#allocation8 + $0x58] sm:$0xff] %v647
    %712 = vst [vmem:[#allocation8 + $0x60] sm:$0xff] %v648
    %713 = vst [vmem:[#allocation8 + $0x68] sm:$0xff] %v649
    %714 = vst [vmem:[#allocation8 + $0x70] sm:$0xff] %v650
    %715 = vst [vmem:[#allocation8 + $0x78] sm:$0xff] %v651
    %716 = vst [vmem:[#allocation8 + $0x80] sm:$0xff] %v652
    %717 = vst [vmem:[#allocation8 + $0x88] sm:$0xff] %v653
    %718 = vst [vmem:[#allocation8 + $0x90] sm:$0xff] %v654
    %719 = vst [vmem:[#allocation8 + $0x98] sm:$0xff] %v655
    %720 = vst [vmem:[#allocation8 + $0xa0] sm:$0xff] %v656
    %721 = vst [vmem:[#allocation8 + $0xa8] sm:$0xff] %v657
    %722 = vst [vmem:[#allocation8 + $0xb0] sm:$0xff] %v658
    %723 = vst [vmem:[#allocation8 + $0xb8] sm:$0xff] %v659
    %724 = vst [vmem:[#allocation8 + $0xc0] sm:$0xff] %v660
    %725 = vst [vmem:[#allocation8 + $0xc8] sm:$0xff] %v661
    %726 = vst [vmem:[#allocation8 + $0xd0] sm:$0xff] %v662
    %727 = vst [vmem:[#allocation8 + $0xd8] sm:$0xff] %v663
    %728 = vst [vmem:[#allocation8 + $0xe0] sm:$0xff] %v664
    %729 = vst [vmem:[#allocation8 + $0xe8] sm:$0xff] %v665
    %730 = vst [vmem:[#allocation8 + $0xf0] sm:$0xff] %v666
    %731 = vst [vmem:[#allocation8 + $0xf8] sm:$0xff] %v667
    %732 = vst [vmem:[#allocation8 + $0x100] sm:$0xff] %v668
    %733 = vst [vmem:[#allocation8 + $0x108] sm:$0xff] %v669
    %734 = vst [vmem:[#allocation8 + $0x110] sm:$0xff] %v670
    %735 = vst [vmem:[#allocation8 + $0x118] sm:$0xff] %v671
    %736 = vst [vmem:[#allocation8 + $0x120] sm:$0xff] %v672
    %737 = vst [vmem:[#allocation8 + $0x128] sm:$0xff] %v673
    %738 = vst [vmem:[#allocation8 + $0x130] sm:$0xff] %v674
    %739 = vst [vmem:[#allocation8 + $0x138] sm:$0xff] %v675
    %740 = vst [vmem:[#allocation8 + $0x140] sm:$0xff] %v676
    %741 = vst [vmem:[#allocation8 + $0x148] sm:$0xff] %v677
    %742 = vst [vmem:[#allocation8 + $0x150] sm:$0xff] %v678
    %743 = vst [vmem:[#allocation8 + $0x158] sm:$0xff] %v679
    %744 = vst [vmem:[#allocation8 + $0x160] sm:$0xff] %v680
    %745 = vst [vmem:[#allocation8 + $0x168] sm:$0xff] %v681
    %746 = vst [vmem:[#allocation8 + $0x170] sm:$0xff] %v682
    %747 = vst [vmem:[#allocation8 + $0x178] sm:$0xff] %v683
    %748 = vst [vmem:[#allocation8 + $0x180] sm:$0xff] %v684
    %749 = vst [vmem:[#allocation8 + $0x188] sm:$0xff] %v685
    %750 = vst [vmem:[#allocation8 + $0x190] sm:$0xff] %v686
    %751 = vst [vmem:[#allocation8 + $0x198] sm:$0xff] %v687
    %752 = vst [vmem:[#allocation8 + $0x1a0] sm:$0xff] %v688
    %753 = vst [vmem:[#allocation8 + $0x1a8] sm:$0xff] %v689
    %754 = vst [vmem:[#allocation8 + $0x1b0] sm:$0xff] %v690
    %755 = vst [vmem:[#allocation8 + $0x1b8] sm:$0xff] %v691
    %756 = vst [vmem:[#allocation8 + $0x1c0] sm:$0xff] %v692
    %757 = vst [vmem:[#allocation8 + $0x1c8] sm:$0xff] %v693
    %758 = vst [vmem:[#allocation8 + $0x1d0] sm:$0xff] %v694
    %759 = vst [vmem:[#allocation8 + $0x1d8] sm:$0xff] %v695
    %760 = vst [vmem:[#allocation8 + $0x1e0] sm:$0xff] %v696
    %761 = vst [vmem:[#allocation8 + $0x1e8] sm:$0xff] %v697
    %762 = vst [vmem:[#allocation8 + $0x1f0] sm:$0xff] %v698
    %763 = vst [vmem:[#allocation8 + $0x1f8] sm:$0xff] %v699
    // Predicated region
    $region26: #{tpu_custom_call.1} parent=1 // pred_check
      _
    $region27: #{tpu_custom_call.1} parent=1 // pred_check_branch
      %765 = sbr.rel (0) target = $region29
    $region28: #{tpu_custom_call.1} parent=1 // pred_region
      %767 = vsyncadd [#allocation4], 0
      %s768 = sshll.u32 [#allocation8], 4
      %s769 = int_to_ptr.vmem [resolvable:$true] %s768
      %s770 = sshll.u32 %s3, 4
      %s771 = int_to_ptr.hbm [resolvable:$true] %s770
      %776 = dma.vmem_to_hbm [thread:$0]  %s769, 8192, %s771, [#allocation4], 128, 128, 8
    $region29: #{tpu_custom_call.1} parent=1 // pred_fallthru
      _
    // Predicated region
    $region30: #{tpu_custom_call.1} parent=1 // pred_check
      _
    $region31: #{tpu_custom_call.1} parent=1 // pred_check_branch
      %778 = sbr.rel (0) target = $region33
    $region32: #{tpu_custom_call.1} parent=1 // pred_region
      %780 = dma.done [#allocation4], 8192
    $region33: #{tpu_custom_call.1} parent=1 // pred_fallthru
      _
    %781 = vsyncpa [#allocation3], 1
    %782 = vsyncpa [#allocation6], 1
    %783 = vsyncpa [#allocation4], 1

</llo_original>
